<compile_context>
chip_gen: v6e
topology: v6e:2x2x1
jax: 0.10.0
libtpu: 0.0.40
codegen_flags: <defaults>
</compile_context>

<pallas_src>
import functools
import math

import jax
import jax.numpy as jnp
from jax import lax
from jax.experimental import pallas as pl
from jax.experimental.pallas import tpu as pltpu


def _round_up(x, m):
    return ((x + m - 1) // m) * m


def _cdiv(a, b):
    return (a + b - 1) // b


def _sdr_kernel(est_ref, src_ref, out_ref,
                acc_s, acc_e, acc_ss, acc_se, acc_ee,
                *, n_samples, tile_t, chunk_w, need_mask,
                min_sdr_pwr, eps1, eps2):
    t = pl.program_id(1)

    @pl.when(t == 0)
    def _():
        acc_s[...] = jnp.zeros_like(acc_s)
        acc_e[...] = jnp.zeros_like(acc_e)
        acc_ss[...] = jnp.zeros_like(acc_ss)
        acc_se[...] = jnp.zeros_like(acc_se)
        acc_ee[...] = jnp.zeros_like(acc_ee)

    rows = acc_s.shape[0]
    n_chunks = tile_t // chunk_w

    # Lane-partial moment sums, carried in vector registers across the
    # statically unrolled chunk loop; one VMEM scratch round-trip per grid step.
    ps, pe = acc_s[...], acc_e[...]
    pss, pse, pee = acc_ss[...], acc_se[...], acc_ee[...]

    if need_mask:
        # Columns of this tile beyond the true signal length are garbage
        # (no wrapper padding) and must contribute zero.
        valid_cols = n_samples - t * tile_t            # scalar; >= tile_t except last tile
        lane_ids = lax.broadcasted_iota(jnp.int32, (rows, chunk_w), 1)

    for c in range(n_chunks):                          # static unroll -> static lane slices
        c0 = c * chunk_w
        e = est_ref[:, c0:c0 + chunk_w].astype(jnp.float32)
        s = src_ref[:, c0:c0 + chunk_w].astype(jnp.float32)
        if need_mask:
            ok = lane_ids < (valid_cols - c0)
            e = jnp.where(ok, e, 0.0)
            s = jnp.where(ok, s, 0.0)
        ps = ps + s
        pe = pe + e
        pss = pss + s * s
        pse = pse + s * e
        pee = pee + e * e

    acc_s[...], acc_e[...] = ps, pe
    acc_ss[...], acc_se[...], acc_ee[...] = pss, pse, pee

    @pl.when(t == pl.num_programs(1) - 1)
    def _():
        inv_n = 1.0 / n_samples
        ms = jnp.sum(ps, axis=-1, keepdims=True) * inv_n        # mean(src)
        me = jnp.sum(pe, axis=-1, keepdims=True) * inv_n        # mean(est)
        c_ss = jnp.sum(pss, axis=-1, keepdims=True) * inv_n - ms * ms   # mean(src'^2)
        c_se = jnp.sum(pse, axis=-1, keepdims=True) * inv_n - ms * me   # mean(src'*est')
        c_ee = jnp.sum(pee, axis=-1, keepdims=True) * inv_n - me * me   # mean(est'^2)

        a = c_se / jnp.maximum(c_ss, eps1)
        s_pwr = a * a * c_ss
        e_pwr = c_ee - 2.0 * a * c_se + s_pwr
        ratio = s_pwr / (e_pwr + min_sdr_pwr * s_pwr + eps2) + eps2
        out_ref[...] = (-10.0 * jnp.log10(ratio)).astype(out_ref.dtype)


def sdr_loss(wav_est, wav_src, *, min_sdr=-30.0, eps1=1e-6, eps2=1e-5):
    """SDR loss over the trailing axis. Inputs: [..., T] -> loss: [...] (float32)."""
    assert wav_est.shape == wav_src.shape
    assert wav_est.dtype == wav_src.dtype
    *lead, T = wav_est.shape
    B = math.prod(lead) if lead else 1

    # Leading-dim merge only: metadata reshape, no extra HBM pass, no cast, no pad.
    est2 = wav_est.reshape(B, T)
    src2 = wav_src.reshape(B, T)
    itemsize = jnp.dtype(wav_est.dtype).itemsize

    # ---- tiling choices ---------------------------------------------------
    # Rows per block: small so the 5 moment partials stay register-resident.
    # Grow (up to 32) only for short signals, keeping >=2 batch blocks when
    # possible so both v7x TensorCores get work.
    if B < 8:
        bB = B
    else:
        bB = 8
        while bB < 32 and B >= 4 * bB and bB * _round_up(T, 128) * itemsize < (2 << 20):
            bB *= 2
    # Lane chunk width: ~4096 elements (4 vregs) per input per unrolled step.
    CW = max(128, min(512, 4096 // max(bB, 1)))
    # Time tile: multiple of CW, at most 128 chunks (~1-2 MiB per input) so the
    # double-buffered working set stays small on every TPU generation.
    tT = min(_round_up(T, CW), 128 * CW)
    nb = _cdiv(B, bB)
    nt = _cdiv(T, tT)

    kernel = functools.partial(
        _sdr_kernel,
        n_samples=T,
        tile_t=tT,
        chunk_w=CW,
        need_mask=(T % tT != 0),
        min_sdr_pwr=float(10.0 ** (min_sdr / 10.0)),
        eps1=float(eps1),
        eps2=float(eps2),
    )

    out = pl.pallas_call(
        kernel,
        out_shape=jax.ShapeDtypeStruct((B, 1), jnp.float32),
        grid_spec=pltpu.PrefetchScalarGridSpec(
            num_scalar_prefetch=0,
            grid=(nb, nt),                     # batch blocks (parallel), time tiles (reduction)
            in_specs=[
                pl.BlockSpec((bB, tT), lambda b, t: (b, t)),   # est (native dtype)
                pl.BlockSpec((bB, tT), lambda b, t: (b, t)),   # src (native dtype)
            ],
            out_specs=pl.BlockSpec((bB, 1), lambda b, t: (b, 0)),
            scratch_shapes=[pltpu.VMEM((bB, CW), jnp.float32)] * 5,
        ),
        compiler_params=pltpu.CompilerParams(
            dimension_semantics=("parallel", "arbitrary"),
            vmem_limit_bytes=32 * 1024 * 1024,
        ),
    )(est2, src2)

    loss = out[:, 0]
    return loss.reshape(tuple(lead)) if lead else loss[0]


def sdr_loss_reference(wav_est, wav_src, *, min_sdr=-30.0, eps1=1e-6, eps2=1e-5):
    """Pure-JAX reference mirroring the PyTorch forward exactly (two-pass)."""
    min_sdr_pwr = 10.0 ** (min_sdr / 10.0)
    wav_src = wav_src - wav_src.mean(axis=-1, keepdims=True)
    wav_est = wav_est - wav_est.mean(axis=-1, keepdims=True)
    a = (wav_src * wav_est).mean(axis=-1, keepdims=True) / jnp.maximum(
        jnp.square(wav_src).mean(axis=-1, keepdims=True), eps1)
    wav_src = a * wav_src
    s_pwr = jnp.square(wav_src).mean(axis=-1)
    e_pwr = jnp.square(wav_est - wav_src).mean(axis=-1)
    return -10.0 * jnp.log10(s_pwr / (e_pwr + min_sdr_pwr * s_pwr + eps2) + eps2)


if __name__ == "__main__":
    key = jax.random.PRNGKey(0)

    # Case 1: batch=2, sources=4, samples=2048 (aligned, no masking path).
    B, S, T = 2, 4, 2048
    k_src, k_noise, k2_src, k2_noise = jax.random.split(key, 4)
    wav_src = jax.random.normal(k_src, (B, S, T), jnp.float32)
    wav_est = wav_src + 0.1 * jax.random.normal(k_noise, (B, S, T), jnp.float32)

    out = jax.block_until_ready(sdr_loss(wav_est, wav_src))
    ref = sdr_loss_reference(wav_est, wav_src)
    assert out.shape == (B, S), out.shape
    assert jnp.allclose(out, ref, atol=1e-3, rtol=1e-3), "case1 mismatch vs reference"

    # Case 2: ragged shapes (rows not multiple of 8, T not multiple of 128)
    # exercising the in-kernel last-tile mask and partial blocks (no padding).
    B2, T2 = 10, 1000
    wav_src2 = jax.random.normal(k2_src, (B2, T2), jnp.float32)
    wav_est2 = wav_src2 + 0.2 * jax.random.normal(k2_noise, (B2, T2), jnp.float32)

    out2 = jax.block_until_ready(sdr_loss(wav_est2, wav_src2))
    ref2 = sdr_loss_reference(wav_est2, wav_src2)
    assert out2.shape == (B2,), out2.shape
    assert jnp.allclose(out2, ref2, atol=1e-3, rtol=1e-3), "case2 mismatch vs reference"

    print("KERNEL_OK")
</pallas_src>

<mosaic_0001>
module attributes {stable_mosaic.version = 11 : i64} {
  func.func @_sdr_kernel(%arg0: i32, %arg1: i32, %arg2: memref<8x2048xf32, #tpu.memory_space<vmem>>, %arg3: memref<8x2048xf32, #tpu.memory_space<vmem>>, %arg4: memref<8x1xf32, #tpu.memory_space<vmem>>, %arg5: memref<8x512xf32, #tpu.memory_space<vmem>>, %arg6: memref<8x512xf32, #tpu.memory_space<vmem>>, %arg7: memref<8x512xf32, #tpu.memory_space<vmem>>, %arg8: memref<8x512xf32, #tpu.memory_space<vmem>>, %arg9: memref<8x512xf32, #tpu.memory_space<vmem>>) attributes {dimension_semantics = [#tpu.dimension_semantics<parallel>, #tpu.dimension_semantics<arbitrary>], iteration_bounds = array<i64: 1, 1>, scalar_prefetch = 0 : i64, scratch_operands = 5 : i64, tpu.core_type = #tpu.core_type<tc>, window_params = [{transform_indices = @transform_0, window_bounds = array<i64: 8, 2048>}, {transform_indices = @transform_1, window_bounds = array<i64: 8, 2048>}, {transform_indices = @transform_2, window_bounds = array<i64: 8, 1>}]} {
    %c0_i32 = arith.constant 0 : i32
    %0 = arith.cmpi eq, %arg1, %c0_i32 : i32
    %1 = arith.extui %0 : i1 to i32
    %c0_i32_0 = arith.constant 0 : i32
    %2 = arith.cmpi ne, %1, %c0_i32_0 : i32
    scf.if %2 {
      %cst = arith.constant 0.000000e+00 : f32
      %56 = vector.broadcast %cst : f32 to vector<8x512xf32>
      %c0_35 = arith.constant 0 : index
      %c0_36 = arith.constant 0 : index
      %57 = vector.load %arg5[%c0_35, %c0_36] : memref<8x512xf32, #tpu.memory_space<vmem>>, vector<8x512xf32>
      tpu.vector_store %arg5[%c0_35, %c0_36], %56 {strides = array<i32>} : memref<8x512xf32, #tpu.memory_space<vmem>>, vector<8x512xf32>,
      %cst_37 = arith.constant 0.000000e+00 : f32
      %58 = vector.broadcast %cst_37 : f32 to vector<8x512xf32>
      %c0_38 = arith.constant 0 : index
      %c0_39 = arith.constant 0 : index
      %59 = vector.load %arg6[%c0_38, %c0_39] : memref<8x512xf32, #tpu.memory_space<vmem>>, vector<8x512xf32>
      tpu.vector_store %arg6[%c0_38, %c0_39], %58 {strides = array<i32>} : memref<8x512xf32, #tpu.memory_space<vmem>>, vector<8x512xf32>,
      %cst_40 = arith.constant 0.000000e+00 : f32
      %60 = vector.broadcast %cst_40 : f32 to vector<8x512xf32>
      %c0_41 = arith.constant 0 : index
      %c0_42 = arith.constant 0 : index
      %61 = vector.load %arg7[%c0_41, %c0_42] : memref<8x512xf32, #tpu.memory_space<vmem>>, vector<8x512xf32>
      tpu.vector_store %arg7[%c0_41, %c0_42], %60 {strides = array<i32>} : memref<8x512xf32, #tpu.memory_space<vmem>>, vector<8x512xf32>,
      %cst_43 = arith.constant 0.000000e+00 : f32
      %62 = vector.broadcast %cst_43 : f32 to vector<8x512xf32>
      %c0_44 = arith.constant 0 : index
      %c0_45 = arith.constant 0 : index
      %63 = vector.load %arg8[%c0_44, %c0_45] : memref<8x512xf32, #tpu.memory_space<vmem>>, vector<8x512xf32>
      tpu.vector_store %arg8[%c0_44, %c0_45], %62 {strides = array<i32>} : memref<8x512xf32, #tpu.memory_space<vmem>>, vector<8x512xf32>,
      %cst_46 = arith.constant 0.000000e+00 : f32
      %64 = vector.broadcast %cst_46 : f32 to vector<8x512xf32>
      %c0_47 = arith.constant 0 : index
      %c0_48 = arith.constant 0 : index
      %65 = vector.load %arg9[%c0_47, %c0_48] : memref<8x512xf32, #tpu.memory_space<vmem>>, vector<8x512xf32>
      tpu.vector_store %arg9[%c0_47, %c0_48], %64 {strides = array<i32>} : memref<8x512xf32, #tpu.memory_space<vmem>>, vector<8x512xf32>,
    } else {
    }
    %c0 = arith.constant 0 : index
    %c0_1 = arith.constant 0 : index
    %3 = vector.load %arg5[%c0, %c0_1] : memref<8x512xf32, #tpu.memory_space<vmem>>, vector<8x512xf32>
    %c0_2 = arith.constant 0 : index
    %c0_3 = arith.constant 0 : index
    %4 = vector.load %arg6[%c0_2, %c0_3] : memref<8x512xf32, #tpu.memory_space<vmem>>, vector<8x512xf32>
    %c0_4 = arith.constant 0 : index
    %c0_5 = arith.constant 0 : index
    %5 = vector.load %arg7[%c0_4, %c0_5] : memref<8x512xf32, #tpu.memory_space<vmem>>, vector<8x512xf32>
    %c0_6 = arith.constant 0 : index
    %c0_7 = arith.constant 0 : index
    %6 = vector.load %arg8[%c0_6, %c0_7] : memref<8x512xf32, #tpu.memory_space<vmem>>, vector<8x512xf32>
    %c0_8 = arith.constant 0 : index
    %c0_9 = arith.constant 0 : index
    %7 = vector.load %arg9[%c0_8, %c0_9] : memref<8x512xf32, #tpu.memory_space<vmem>>, vector<8x512xf32>
    %c0_10 = arith.constant 0 : index
    %c0_11 = arith.constant 0 : index
    %8 = vector.load %arg2[%c0_10, %c0_11] : memref<8x2048xf32, #tpu.memory_space<vmem>>, vector<8x512xf32>
    %c0_12 = arith.constant 0 : index
    %c0_13 = arith.constant 0 : index
    %9 = vector.load %arg3[%c0_12, %c0_13] : memref<8x2048xf32, #tpu.memory_space<vmem>>, vector<8x512xf32>
    %10 = arith.addf %3, %9 : vector<8x512xf32>
    %11 = arith.addf %4, %8 : vector<8x512xf32>
    %12 = arith.mulf %9, %9 : vector<8x512xf32>
    %13 = arith.addf %5, %12 : vector<8x512xf32>
    %14 = arith.mulf %9, %8 : vector<8x512xf32>
    %15 = arith.addf %6, %14 : vector<8x512xf32>
    %16 = arith.mulf %8, %8 : vector<8x512xf32>
    %17 = arith.addf %7, %16 : vector<8x512xf32>
    %c0_14 = arith.constant 0 : index
    %c512 = arith.constant 512 : index
    %18 = vector.load %arg2[%c0_14, %c512] : memref<8x2048xf32, #tpu.memory_space<vmem>>, vector<8x512xf32>
    %c0_15 = arith.constant 0 : index
    %c512_16 = arith.constant 512 : index
    %19 = vector.load %arg3[%c0_15, %c512_16] : memref<8x2048xf32, #tpu.memory_space<vmem>>, vector<8x512xf32>
    %20 = arith.addf %10, %19 : vector<8x512xf32>
    %21 = arith.addf %11, %18 : vector<8x512xf32>
    %22 = arith.mulf %19, %19 : vector<8x512xf32>
    %23 = arith.addf %13, %22 : vector<8x512xf32>
    %24 = arith.mulf %19, %18 : vector<8x512xf32>
    %25 = arith.addf %15, %24 : vector<8x512xf32>
    %26 = arith.mulf %18, %18 : vector<8x512xf32>
    %27 = arith.addf %17, %26 : vector<8x512xf32>
    %c0_17 = arith.constant 0 : index
    %c1024 = arith.constant 1024 : index
    %28 = vector.load %arg2[%c0_17, %c1024] : memref<8x2048xf32, #tpu.memory_space<vmem>>, vector<8x512xf32>
    %c0_18 = arith.constant 0 : index
    %c1024_19 = arith.constant 1024 : index
    %29 = vector.load %arg3[%c0_18, %c1024_19] : memref<8x2048xf32, #tpu.memory_space<vmem>>, vector<8x512xf32>
    %30 = arith.addf %20, %29 : vector<8x512xf32>
    %31 = arith.addf %21, %28 : vector<8x512xf32>
    %32 = arith.mulf %29, %29 : vector<8x512xf32>
    %33 = arith.addf %23, %32 : vector<8x512xf32>
    %34 = arith.mulf %29, %28 : vector<8x512xf32>
    %35 = arith.addf %25, %34 : vector<8x512xf32>
    %36 = arith.mulf %28, %28 : vector<8x512xf32>
    %37 = arith.addf %27, %36 : vector<8x512xf32>
    %c0_20 = arith.constant 0 : index
    %c1536 = arith.constant 1536 : index
    %38 = vector.load %arg2[%c0_20, %c1536] : memref<8x2048xf32, #tpu.memory_space<vmem>>, vector<8x512xf32>
    %c0_21 = arith.constant 0 : index
    %c1536_22 = arith.constant 1536 : index
    %39 = vector.load %arg3[%c0_21, %c1536_22] : memref<8x2048xf32, #tpu.memory_space<vmem>>, vector<8x512xf32>
    %40 = arith.addf %30, %39 : vector<8x512xf32>
    %41 = arith.addf %31, %38 : vector<8x512xf32>
    %42 = arith.mulf %39, %39 : vector<8x512xf32>
    %43 = arith.addf %33, %42 : vector<8x512xf32>
    %44 = arith.mulf %39, %38 : vector<8x512xf32>
    %45 = arith.addf %35, %44 : vector<8x512xf32>
    %46 = arith.mulf %38, %38 : vector<8x512xf32>
    %47 = arith.addf %37, %46 : vector<8x512xf32>
    %c0_23 = arith.constant 0 : index
    %c0_24 = arith.constant 0 : index
    %48 = vector.load %arg5[%c0_23, %c0_24] : memref<8x512xf32, #tpu.memory_space<vmem>>, vector<8x512xf32>
    tpu.vector_store %arg5[%c0_23, %c0_24], %40 {strides = array<i32>} : memref<8x512xf32, #tpu.memory_space<vmem>>, vector<8x512xf32>,
    %c0_25 = arith.constant 0 : index
    %c0_26 = arith.constant 0 : index
    %49 = vector.load %arg6[%c0_25, %c0_26] : memref<8x512xf32, #tpu.memory_space<vmem>>, vector<8x512xf32>
    tpu.vector_store %arg6[%c0_25, %c0_26], %41 {strides = array<i32>} : memref<8x512xf32, #tpu.memory_space<vmem>>, vector<8x512xf32>,
    %c0_27 = arith.constant 0 : index
    %c0_28 = arith.constant 0 : index
    %50 = vector.load %arg7[%c0_27, %c0_28] : memref<8x512xf32, #tpu.memory_space<vmem>>, vector<8x512xf32>
    tpu.vector_store %arg7[%c0_27, %c0_28], %43 {strides = array<i32>} : memref<8x512xf32, #tpu.memory_space<vmem>>, vector<8x512xf32>,
    %c0_29 = arith.constant 0 : index
    %c0_30 = arith.constant 0 : index
    %51 = vector.load %arg8[%c0_29, %c0_30] : memref<8x512xf32, #tpu.memory_space<vmem>>, vector<8x512xf32>
    tpu.vector_store %arg8[%c0_29, %c0_30], %45 {strides = array<i32>} : memref<8x512xf32, #tpu.memory_space<vmem>>, vector<8x512xf32>,
    %c0_31 = arith.constant 0 : index
    %c0_32 = arith.constant 0 : index
    %52 = vector.load %arg9[%c0_31, %c0_32] : memref<8x512xf32, #tpu.memory_space<vmem>>, vector<8x512xf32>
    tpu.vector_store %arg9[%c0_31, %c0_32], %47 {strides = array<i32>} : memref<8x512xf32, #tpu.memory_space<vmem>>, vector<8x512xf32>,
    %c0_i32_33 = arith.constant 0 : i32
    %53 = arith.cmpi eq, %arg1, %c0_i32_33 : i32
    %54 = arith.extui %53 : i1 to i32
    %c0_i32_34 = arith.constant 0 : i32
    %55 = arith.cmpi ne, %54, %c0_i32_34 : i32
    scf.if %55 {
      %cst = arith.constant dense<0.000000e+00> : vector<8xf32>
      %56 = vector.multi_reduction <add>, %40, %cst [1] : vector<8x512xf32> to vector<8xf32>
      %57 = vector.shape_cast %56 : vector<8xf32> to vector<8x1xf32>
      %cst_35 = arith.constant 4.8828125E-4 : f32
      %58 = vector.broadcast %cst_35 : f32 to vector<8x1xf32>
      %59 = arith.mulf %57, %58 : vector<8x1xf32>
      %cst_36 = arith.constant dense<0.000000e+00> : vector<8xf32>
      %60 = vector.multi_reduction <add>, %41, %cst_36 [1] : vector<8x512xf32> to vector<8xf32>
      %61 = vector.shape_cast %60 : vector<8xf32> to vector<8x1xf32>
      %cst_37 = arith.constant 4.8828125E-4 : f32
      %62 = vector.broadcast %cst_37 : f32 to vector<8x1xf32>
      %63 = arith.mulf %61, %62 : vector<8x1xf32>
      %cst_38 = arith.constant dense<0.000000e+00> : vector<8xf32>
      %64 = vector.multi_reduction <add>, %43, %cst_38 [1] : vector<8x512xf32> to vector<8xf32>
      %65 = vector.shape_cast %64 : vector<8xf32> to vector<8x1xf32>
      %cst_39 = arith.constant 4.8828125E-4 : f32
      %66 = vector.broadcast %cst_39 : f32 to vector<8x1xf32>
      %67 = arith.mulf %65, %66 : vector<8x1xf32>
      %68 = arith.mulf %59, %59 : vector<8x1xf32>
      %69 = arith.subf %67, %68 : vector<8x1xf32>
      %cst_40 = arith.constant dense<0.000000e+00> : vector<8xf32>
      %70 = vector.multi_reduction <add>, %45, %cst_40 [1] : vector<8x512xf32> to vector<8xf32>
      %71 = vector.shape_cast %70 : vector<8xf32> to vector<8x1xf32>
      %cst_41 = arith.constant 4.8828125E-4 : f32
      %72 = vector.broadcast %cst_41 : f32 to vector<8x1xf32>
      %73 = arith.mulf %71, %72 : vector<8x1xf32>
      %74 = arith.mulf %59, %63 : vector<8x1xf32>
      %75 = arith.subf %73, %74 : vector<8x1xf32>
      %cst_42 = arith.constant dense<0.000000e+00> : vector<8xf32>
      %76 = vector.multi_reduction <add>, %47, %cst_42 [1] : vector<8x512xf32> to vector<8xf32>
      %77 = vector.shape_cast %76 : vector<8xf32> to vector<8x1xf32>
      %cst_43 = arith.constant 4.8828125E-4 : f32
      %78 = vector.broadcast %cst_43 : f32 to vector<8x1xf32>
      %79 = arith.mulf %77, %78 : vector<8x1xf32>
      %80 = arith.mulf %63, %63 : vector<8x1xf32>
      %81 = arith.subf %79, %80 : vector<8x1xf32>
      %cst_44 = arith.constant 9.99999997E-7 : f32
      %82 = vector.broadcast %cst_44 : f32 to vector<8x1xf32>
      %83 = arith.maximumf %69, %82 : vector<8x1xf32>
      %84 = arith.divf %75, %83 : vector<8x1xf32>
      %85 = arith.mulf %84, %84 : vector<8x1xf32>
      %86 = arith.mulf %85, %69 : vector<8x1xf32>
      %cst_45 = arith.constant 2.000000e+00 : f32
      %87 = vector.broadcast %cst_45 : f32 to vector<8x1xf32>
      %88 = arith.mulf %87, %84 : vector<8x1xf32>
      %89 = arith.mulf %88, %75 : vector<8x1xf32>
      %90 = arith.subf %81, %89 : vector<8x1xf32>
      %91 = arith.addf %90, %86 : vector<8x1xf32>
      %cst_46 = arith.constant 1.000000e-03 : f32
      %92 = vector.broadcast %cst_46 : f32 to vector<8x1xf32>
      %93 = arith.mulf %92, %86 : vector<8x1xf32>
      %94 = arith.addf %91, %93 : vector<8x1xf32>
      %cst_47 = arith.constant 9.99999974E-6 : f32
      %95 = vector.broadcast %cst_47 : f32 to vector<8x1xf32>
      %96 = arith.addf %94, %95 : vector<8x1xf32>
      %97 = arith.divf %86, %96 : vector<8x1xf32>
      %cst_48 = arith.constant 9.99999974E-6 : f32
      %98 = vector.broadcast %cst_48 : f32 to vector<8x1xf32>
      %99 = arith.addf %97, %98 : vector<8x1xf32>
      %100 = math.log %99 : vector<8x1xf32>
      %cst_49 = arith.constant 0.434294492 : f32
      %101 = vector.broadcast %cst_49 : f32 to vector<8x1xf32>
      %102 = arith.mulf %100, %101 : vector<8x1xf32>
      %cst_50 = arith.constant -1.000000e+01 : f32
      %103 = vector.broadcast %cst_50 : f32 to vector<8x1xf32>
      %104 = arith.mulf %103, %102 : vector<8x1xf32>
      %c0_51 = arith.constant 0 : index
      %c0_52 = arith.constant 0 : index
      %105 = vector.load %arg4[%c0_51, %c0_52] : memref<8x1xf32, #tpu.memory_space<vmem>>, vector<8x1xf32>
      tpu.vector_store %arg4[%c0_51, %c0_52], %104 {strides = array<i32>} : memref<8x1xf32, #tpu.memory_space<vmem>>, vector<8x1xf32>,
    } else {
    }
    return
  }
  func.func @transform_0(%arg0: i32, %arg1: i32) -> (i32, i32) {
    %c0_i32 = arith.constant 0 : i32
    return %arg0, %arg1 : i32, i32
  }
  func.func @transform_1(%arg0: i32, %arg1: i32) -> (i32, i32) {
    %c0_i32 = arith.constant 0 : i32
    return %arg0, %arg1 : i32, i32
  }
  func.func @transform_2(%arg0: i32, %arg1: i32) -> (i32, i32) {
    %c0_i32 = arith.constant 0 : i32
    %c0_i32_0 = arith.constant 0 : i32
    return %arg0, %c0_i32 : i32, i32
  }
}

</mosaic_0001>

<llo_original>
// kernel: tpu_custom_call.1
$region0: #{tpu_custom_call.1}
  #allocation0 [shape = 'u32[]', space=smem, size = 0x4, offset = 0x4, fixed_abs, tag = 'smem constant byte address 0x4 - core index']
  #allocation1 [shape = 'u32[144,128]{1,0:T(1,128)}', space=vmem, size = 0x12000, scoped, tag = 'internal scratch']
  #allocation2 [shape = 'f32[8,512]{1,0:T(8,128)}', space=vmem, size = 0x4000, scoped, tag = 'scratch operand']
  #allocation3 [shape = 'f32[8,512]{1,0:T(8,128)}', space=vmem, size = 0x4000, scoped, tag = 'scratch operand']
  #allocation4 [shape = 'f32[8,512]{1,0:T(8,128)}', space=vmem, size = 0x4000, scoped, tag = 'scratch operand']
  #allocation5 [shape = 'f32[8,512]{1,0:T(8,128)}', space=vmem, size = 0x4000, scoped, tag = 'scratch operand']
  #allocation6 [shape = 'f32[8,512]{1,0:T(8,128)}', space=vmem, size = 0x4000, scoped, tag = 'scratch operand']
  %s0 = inlined_call_operand.hbm [shape: f32[8,2048], index: 0, kind: input, shape index: {}]
  %s1 = inlined_call_operand.hbm [shape: f32[8,2048], index: 1, kind: input, shape index: {}]
  %s2 = inlined_call_operand.vmem [shape: f32[8,1], index: 2, kind: output, shape index: {}]
  %s3 = sld [smem:[#allocation0]]
  $region34: #{tpu_custom_call.1} parent=0
    _
  %s5 = ssub.s32 1, %s3
  %s6 = scalar_select 0, %s5, %s3
  $region1: #{tpu_custom_call.1} parent=0
    #allocation7 [shape = 'u8[65536]{0}', space=vmem, size = 0x10000, scoped, tag = 'input window, operand 0, single buffered']
    #allocation8 [shape = 's32[1]{0}', space=sflag, size = 0x4, scoped, tag = 'scoped memory for tpu_custom_call.1']
    #allocation9 [shape = 'u8[65536]{0}', space=vmem, size = 0x10000, scoped, tag = 'input window, operand 1, single buffered']
    #allocation10 [shape = 's32[1]{0}', space=sflag, size = 0x4, scoped, tag = 'scoped memory for tpu_custom_call.1']
    %7 = vsyncpa [#allocation8], 0
    %8 = vsyncpa [#allocation10], 0
    // Predicated region
    $region2: #{tpu_custom_call.1} parent=1 // pred_check
      _
    $region3: #{tpu_custom_call.1} parent=1 // pred_check_branch
      %10 = sbr.rel (0) target = $region5
    $region4: #{tpu_custom_call.1} parent=1 // pred_region
      %s12 = ssub.s32 2048, 2048
      %13 = vsyncadd [#allocation8], %s12
      %s15 = sshll.u32 [#allocation7], 4
      %s16 = int_to_ptr.vmem [resolvable:$true] %s15
      %18 = dma.hbm_to_vmem [thread:$0]  %s0, 2048, %s16, [#allocation8]
    $region5: #{tpu_custom_call.1} parent=1 // pred_fallthru
      _
    // Predicated region
    $region6: #{tpu_custom_call.1} parent=1 // pred_check
      _
    $region7: #{tpu_custom_call.1} parent=1 // pred_check_branch
      %20 = sbr.rel (0) target = $region9
    $region8: #{tpu_custom_call.1} parent=1 // pred_region
      %s22 = ssub.s32 2048, 2048
      %23 = vsyncadd [#allocation10], %s22
      %s25 = sshll.u32 [#allocation9], 4
      %s26 = int_to_ptr.vmem [resolvable:$true] %s25
      %28 = dma.hbm_to_vmem [thread:$0]  %s1, 2048, %s26, [#allocation10]
    $region9: #{tpu_custom_call.1} parent=1 // pred_fallthru
      _
    // Predicated region
    $region10: #{tpu_custom_call.1} parent=1 // pred_check
      _
    $region11: #{tpu_custom_call.1} parent=1 // pred_check_branch
      %30 = sbr.rel (0) target = $region13
    $region12: #{tpu_custom_call.1} parent=1 // pred_region
      %31 = dma.done [#allocation8], 2048
    $region13: #{tpu_custom_call.1} parent=1 // pred_fallthru
      _
    // Predicated region
    $region14: #{tpu_custom_call.1} parent=1 // pred_check
      _
    $region15: #{tpu_custom_call.1} parent=1 // pred_check_branch
      %33 = sbr.rel (0) target = $region17
    $region16: #{tpu_custom_call.1} parent=1 // pred_region
      %34 = dma.done [#allocation10], 2048
    $region17: #{tpu_custom_call.1} parent=1 // pred_fallthru
      _
    %p35 = scmp.eq.s32.totalorder 0, 0
    // Predicated region
    $region18: #{tpu_custom_call.1} parent=1 // pred_check
      %p36 = pneg %p35
    $region19: #{tpu_custom_call.1} parent=1 // pred_check_branch
      %38 = sbr.rel (%p36) target = $region21
    $region20: #{tpu_custom_call.1} parent=1 // pred_region
      %39 = vst [vmem:[#allocation2] sm:$0xff] 0.0
      %40 = vst [vmem:[#allocation2 + $0x8] sm:$0xff] 0.0
      %41 = vst [vmem:[#allocation2 + $0x10] sm:$0xff] 0.0
      %42 = vst [vmem:[#allocation2 + $0x18] sm:$0xff] 0.0
      %43 = vst [vmem:[#allocation3] sm:$0xff] 0.0
      %44 = vst [vmem:[#allocation3 + $0x8] sm:$0xff] 0.0
      %45 = vst [vmem:[#allocation3 + $0x10] sm:$0xff] 0.0
      %46 = vst [vmem:[#allocation3 + $0x18] sm:$0xff] 0.0
      %47 = vst [vmem:[#allocation4] sm:$0xff] 0.0
      %48 = vst [vmem:[#allocation4 + $0x8] sm:$0xff] 0.0
      %49 = vst [vmem:[#allocation4 + $0x10] sm:$0xff] 0.0
      %50 = vst [vmem:[#allocation4 + $0x18] sm:$0xff] 0.0
      %51 = vst [vmem:[#allocation5] sm:$0xff] 0.0
      %52 = vst [vmem:[#allocation5 + $0x8] sm:$0xff] 0.0
      %53 = vst [vmem:[#allocation5 + $0x10] sm:$0xff] 0.0
      %54 = vst [vmem:[#allocation5 + $0x18] sm:$0xff] 0.0
      %55 = vst [vmem:[#allocation6] sm:$0xff] 0.0
      %56 = vst [vmem:[#allocation6 + $0x8] sm:$0xff] 0.0
      %57 = vst [vmem:[#allocation6 + $0x10] sm:$0xff] 0.0
      %58 = vst [vmem:[#allocation6 + $0x18] sm:$0xff] 0.0
    $region21: #{tpu_custom_call.1} parent=1 // pred_fallthru
      _
    %v59 = vld [vmem:[#allocation2] sm:$0xff]
    %v60 = vld [vmem:[#allocation2 + $0x8] sm:$0xff]
    %v61 = vld [vmem:[#allocation2 + $0x10] sm:$0xff]
    %v62 = vld [vmem:[#allocation2 + $0x18] sm:$0xff]
    %v63 = vld [vmem:[#allocation3] sm:$0xff]
    %v64 = vld [vmem:[#allocation3 + $0x8] sm:$0xff]
    %v65 = vld [vmem:[#allocation3 + $0x10] sm:$0xff]
    %v66 = vld [vmem:[#allocation3 + $0x18] sm:$0xff]
    %v67 = vld [vmem:[#allocation4] sm:$0xff]
    %v68 = vld [vmem:[#allocation4 + $0x8] sm:$0xff]
    %v69 = vld [vmem:[#allocation4 + $0x10] sm:$0xff]
    %v70 = vld [vmem:[#allocation4 + $0x18] sm:$0xff]
    %v71 = vld [vmem:[#allocation5] sm:$0xff]
    %v72 = vld [vmem:[#allocation5 + $0x8] sm:$0xff]
    %v73 = vld [vmem:[#allocation5 + $0x10] sm:$0xff]
    %v74 = vld [vmem:[#allocation5 + $0x18] sm:$0xff]
    %v75 = vld [vmem:[#allocation6] sm:$0xff]
    %v76 = vld [vmem:[#allocation6 + $0x8] sm:$0xff]
    %v77 = vld [vmem:[#allocation6 + $0x10] sm:$0xff]
    %v78 = vld [vmem:[#allocation6 + $0x18] sm:$0xff]
    %v79 = vld [vmem:[#allocation7] sm:$0xff]
    %v80 = vld [vmem:[#allocation7 + $0x8] sm:$0xff]
    %v81 = vld [vmem:[#allocation7 + $0x10] sm:$0xff]
    %v82 = vld [vmem:[#allocation7 + $0x18] sm:$0xff]
    %v83 = vld [vmem:[#allocation9] sm:$0xff]
    %v84 = vld [vmem:[#allocation9 + $0x8] sm:$0xff]
    %v85 = vld [vmem:[#allocation9 + $0x10] sm:$0xff]
    %v86 = vld [vmem:[#allocation9 + $0x18] sm:$0xff]
    %v87 = vadd.f32 %v59, %v83
    %v88 = vadd.f32 %v60, %v84
    %v89 = vadd.f32 %v61, %v85
    %v90 = vadd.f32 %v62, %v86
    %v91 = vadd.f32 %v63, %v79
    %v92 = vadd.f32 %v64, %v80
    %v93 = vadd.f32 %v65, %v81
    %v94 = vadd.f32 %v66, %v82
    %v95 = vmul.f32 %v83, %v83
    %v96 = vmul.f32 %v84, %v84
    %v97 = vmul.f32 %v85, %v85
    %v98 = vmul.f32 %v86, %v86
    %v99 = vadd.f32 %v67, %v95
    %v100 = vadd.f32 %v68, %v96
    %v101 = vadd.f32 %v69, %v97
    %v102 = vadd.f32 %v70, %v98
    %v103 = vmul.f32 %v83, %v79
    %v104 = vmul.f32 %v84, %v80
    %v105 = vmul.f32 %v85, %v81
    %v106 = vmul.f32 %v86, %v82
    %v107 = vadd.f32 %v71, %v103
    %v108 = vadd.f32 %v72, %v104
    %v109 = vadd.f32 %v73, %v105
    %v110 = vadd.f32 %v74, %v106
    %v111 = vmul.f32 %v79, %v79
    %v112 = vmul.f32 %v80, %v80
    %v113 = vmul.f32 %v81, %v81
    %v114 = vmul.f32 %v82, %v82
    %v115 = vadd.f32 %v75, %v111
    %v116 = vadd.f32 %v76, %v112
    %v117 = vadd.f32 %v77, %v113
    %v118 = vadd.f32 %v78, %v114
    %v119 = vld [vmem:[#allocation7 + $0x20] sm:$0xff]
    %v120 = vld [vmem:[#allocation7 + $0x28] sm:$0xff]
    %v121 = vld [vmem:[#allocation7 + $0x30] sm:$0xff]
    %v122 = vld [vmem:[#allocation7 + $0x38] sm:$0xff]
    %v123 = vld [vmem:[#allocation9 + $0x20] sm:$0xff]
    %v124 = vld [vmem:[#allocation9 + $0x28] sm:$0xff]
    %v125 = vld [vmem:[#allocation9 + $0x30] sm:$0xff]
    %v126 = vld [vmem:[#allocation9 + $0x38] sm:$0xff]
    %v127 = vadd.f32 %v87, %v123
    %v128 = vadd.f32 %v88, %v124
    %v129 = vadd.f32 %v89, %v125
    %v130 = vadd.f32 %v90, %v126
    %v131 = vadd.f32 %v91, %v119
    %v132 = vadd.f32 %v92, %v120
    %v133 = vadd.f32 %v93, %v121
    %v134 = vadd.f32 %v94, %v122
    %v135 = vmul.f32 %v123, %v123
    %v136 = vmul.f32 %v124, %v124
    %v137 = vmul.f32 %v125, %v125
    %v138 = vmul.f32 %v126, %v126
    %v139 = vadd.f32 %v99, %v135
    %v140 = vadd.f32 %v100, %v136
    %v141 = vadd.f32 %v101, %v137
    %v142 = vadd.f32 %v102, %v138
    %v143 = vmul.f32 %v123, %v119
    %v144 = vmul.f32 %v124, %v120
    %v145 = vmul.f32 %v125, %v121
    %v146 = vmul.f32 %v126, %v122
    %v147 = vadd.f32 %v107, %v143
    %v148 = vadd.f32 %v108, %v144
    %v149 = vadd.f32 %v109, %v145
    %v150 = vadd.f32 %v110, %v146
    %v151 = vmul.f32 %v119, %v119
    %v152 = vmul.f32 %v120, %v120
    %v153 = vmul.f32 %v121, %v121
    %v154 = vmul.f32 %v122, %v122
    %v155 = vadd.f32 %v115, %v151
    %v156 = vadd.f32 %v116, %v152
    %v157 = vadd.f32 %v117, %v153
    %v158 = vadd.f32 %v118, %v154
    %v159 = vld [vmem:[#allocation7 + $0x40] sm:$0xff]
    %v160 = vld [vmem:[#allocation7 + $0x48] sm:$0xff]
    %v161 = vld [vmem:[#allocation7 + $0x50] sm:$0xff]
    %v162 = vld [vmem:[#allocation7 + $0x58] sm:$0xff]
    %v163 = vld [vmem:[#allocation9 + $0x40] sm:$0xff]
    %v164 = vld [vmem:[#allocation9 + $0x48] sm:$0xff]
    %v165 = vld [vmem:[#allocation9 + $0x50] sm:$0xff]
    %v166 = vld [vmem:[#allocation9 + $0x58] sm:$0xff]
    %v167 = vadd.f32 %v127, %v163
    %v168 = vadd.f32 %v128, %v164
    %v169 = vadd.f32 %v129, %v165
    %v170 = vadd.f32 %v130, %v166
    %v171 = vadd.f32 %v131, %v159
    %v172 = vadd.f32 %v132, %v160
    %v173 = vadd.f32 %v133, %v161
    %v174 = vadd.f32 %v134, %v162
    %v175 = vmul.f32 %v163, %v163
    %v176 = vmul.f32 %v164, %v164
    %v177 = vmul.f32 %v165, %v165
    %v178 = vmul.f32 %v166, %v166
    %v179 = vadd.f32 %v139, %v175
    %v180 = vadd.f32 %v140, %v176
    %v181 = vadd.f32 %v141, %v177
    %v182 = vadd.f32 %v142, %v178
    %v183 = vmul.f32 %v163, %v159
    %v184 = vmul.f32 %v164, %v160
    %v185 = vmul.f32 %v165, %v161
    %v186 = vmul.f32 %v166, %v162
    %v187 = vadd.f32 %v147, %v183
    %v188 = vadd.f32 %v148, %v184
    %v189 = vadd.f32 %v149, %v185
    %v190 = vadd.f32 %v150, %v186
    %v191 = vmul.f32 %v159, %v159
    %v192 = vmul.f32 %v160, %v160
    %v193 = vmul.f32 %v161, %v161
    %v194 = vmul.f32 %v162, %v162
    %v195 = vadd.f32 %v155, %v191
    %v196 = vadd.f32 %v156, %v192
    %v197 = vadd.f32 %v157, %v193
    %v198 = vadd.f32 %v158, %v194
    %v199 = vld [vmem:[#allocation7 + $0x60] sm:$0xff]
    %v200 = vld [vmem:[#allocation7 + $0x68] sm:$0xff]
    %v201 = vld [vmem:[#allocation7 + $0x70] sm:$0xff]
    %v202 = vld [vmem:[#allocation7 + $0x78] sm:$0xff]
    %v203 = vld [vmem:[#allocation9 + $0x60] sm:$0xff]
    %v204 = vld [vmem:[#allocation9 + $0x68] sm:$0xff]
    %v205 = vld [vmem:[#allocation9 + $0x70] sm:$0xff]
    %v206 = vld [vmem:[#allocation9 + $0x78] sm:$0xff]
    %v207 = vadd.f32 %v167, %v203
    %v208 = vadd.f32 %v168, %v204
    %v209 = vadd.f32 %v169, %v205
    %v210 = vadd.f32 %v170, %v206
    %v211 = vadd.f32 %v171, %v199
    %v212 = vadd.f32 %v172, %v200
    %v213 = vadd.f32 %v173, %v201
    %v214 = vadd.f32 %v174, %v202
    %v215 = vmul.f32 %v203, %v203
    %v216 = vmul.f32 %v204, %v204
    %v217 = vmul.f32 %v205, %v205
    %v218 = vmul.f32 %v206, %v206
    %v219 = vadd.f32 %v179, %v215
    %v220 = vadd.f32 %v180, %v216
    %v221 = vadd.f32 %v181, %v217
    %v222 = vadd.f32 %v182, %v218
    %v223 = vmul.f32 %v203, %v199
    %v224 = vmul.f32 %v204, %v200
    %v225 = vmul.f32 %v205, %v201
    %v226 = vmul.f32 %v206, %v202
    %v227 = vadd.f32 %v187, %v223
    %v228 = vadd.f32 %v188, %v224
    %v229 = vadd.f32 %v189, %v225
    %v230 = vadd.f32 %v190, %v226
    %v231 = vmul.f32 %v199, %v199
    %v232 = vmul.f32 %v200, %v200
    %v233 = vmul.f32 %v201, %v201
    %v234 = vmul.f32 %v202, %v202
    %v235 = vadd.f32 %v195, %v231
    %v236 = vadd.f32 %v196, %v232
    %v237 = vadd.f32 %v197, %v233
    %v238 = vadd.f32 %v198, %v234
    %239 = vst [vmem:[#allocation2] sm:$0xff] %v207
    %240 = vst [vmem:[#allocation2 + $0x8] sm:$0xff] %v208
    %241 = vst [vmem:[#allocation2 + $0x10] sm:$0xff] %v209
    %242 = vst [vmem:[#allocation2 + $0x18] sm:$0xff] %v210
    %243 = vst [vmem:[#allocation3] sm:$0xff] %v211
    %244 = vst [vmem:[#allocation3 + $0x8] sm:$0xff] %v212
    %245 = vst [vmem:[#allocation3 + $0x10] sm:$0xff] %v213
    %246 = vst [vmem:[#allocation3 + $0x18] sm:$0xff] %v214
    %247 = vst [vmem:[#allocation4] sm:$0xff] %v219
    %248 = vst [vmem:[#allocation4 + $0x8] sm:$0xff] %v220
    %249 = vst [vmem:[#allocation4 + $0x10] sm:$0xff] %v221
    %250 = vst [vmem:[#allocation4 + $0x18] sm:$0xff] %v222
    %251 = vst [vmem:[#allocation5] sm:$0xff] %v227
    %252 = vst [vmem:[#allocation5 + $0x8] sm:$0xff] %v228
    %253 = vst [vmem:[#allocation5 + $0x10] sm:$0xff] %v229
    %254 = vst [vmem:[#allocation5 + $0x18] sm:$0xff] %v230
    %255 = vst [vmem:[#allocation6] sm:$0xff] %v235
    %256 = vst [vmem:[#allocation6 + $0x8] sm:$0xff] %v236
    %257 = vst [vmem:[#allocation6 + $0x10] sm:$0xff] %v237
    %258 = vst [vmem:[#allocation6 + $0x18] sm:$0xff] %v238
    // Predicated region
    $region22: #{tpu_custom_call.1} parent=1 // pred_check
      %p259 = pneg %p35
    $region23: #{tpu_custom_call.1} parent=1 // pred_check_branch
      %261 = sbr.rel (%p259) target = $region25
    $region24: #{tpu_custom_call.1} parent=1 // pred_region
      %v262 = vadd.f32 %v207, %v208
      %v263 = vadd.f32 %v262, %v209
      %v264 = vadd.f32 %v263, %v210
      %265 = vadd.xlane.f32.xlu0 %v264
      %v266 = vpop.xlane.xlu0 %265
      %v267 = vmul.f32 %v266, 0.00048828125
      %v268 = vadd.f32 %v211, %v212
      %v269 = vadd.f32 %v268, %v213
      %v270 = vadd.f32 %v269, %v214
      %271 = vadd.xlane.f32.xlu0 %v270
      %v272 = vpop.xlane.xlu0 %271
      %v273 = vmul.f32 %v272, 0.00048828125
      %v274 = vadd.f32 %v219, %v220
      %v275 = vadd.f32 %v274, %v221
      %v276 = vadd.f32 %v275, %v222
      %277 = vadd.xlane.f32.xlu0 %v276
      %v278 = vpop.xlane.xlu0 %277
      %v279 = vmul.f32 %v278, 0.00048828125
      %v280 = vmul.f32 %v267, %v267
      %v281 = vsub.f32 %v279, %v280
      %v282 = vadd.f32 %v227, %v228
      %v283 = vadd.f32 %v282, %v229
      %v284 = vadd.f32 %v283, %v230
      %285 = vadd.xlane.f32.xlu0 %v284
      %v286 = vpop.xlane.xlu0 %285
      %v287 = vmul.f32 %v286, 0.00048828125
      %v288 = vmul.f32 %v267, %v273
      %v289 = vsub.f32 %v287, %v288
      %v290 = vadd.f32 %v235, %v236
      %v291 = vadd.f32 %v290, %v237
      %v292 = vadd.f32 %v291, %v238
      %293 = vadd.xlane.f32.xlu0 %v292
      %v294 = vpop.xlane.xlu0 %293
      %v295 = vmul.f32 %v294, 0.00048828125
      %v296 = vmul.f32 %v273, %v273
      %v297 = vsub.f32 %v295, %v296
      %v298 = vmax.f32 %v281, 1e-06
      %v299 = vrcp.pop %v298
      %v300 = vmul.f32 %v289, %v299
      %v301 = vmul.f32 %v300, %v300
      %v302 = vmul.f32 %v301, %v281
      %v303 = vmul.f32 %v300, 2.0
      %v304 = vmul.f32 %v303, %v289
      %v305 = vsub.f32 %v297, %v304
      %v306 = vadd.f32 %v305, %v302
      %v307 = vmul.f32 %v302, 0.001
      %v308 = vadd.f32 %v306, %v307
      %v309 = vadd.f32 %v308, 1e-05
      %v310 = vrcp.pop %v309
      %v311 = vmul.f32 %v302, %v310
      %v312 = vadd.f32 %v311, 1e-05
      %v313 = vlog2.pop %v312
      %v314 = vmul.f32 %v313, 0.6931472
      %v315 = vmul.f32 %v314, 0.4342945
      %v316 = vmul.f32 %v315, -10.0
      %vm317 = vcmask 7168
      %318 = vst.msk [vmem:[%s2] sm:$0xff] %vm317, %v316
    $region25: #{tpu_custom_call.1} parent=1 // pred_fallthru
      _
    // Predicated region
    $region26: #{tpu_custom_call.1} parent=1 // pred_check
      _
    $region27: #{tpu_custom_call.1} parent=1 // pred_check_branch
      %320 = sbr.rel (0) target = $region29
    $region28: #{tpu_custom_call.1} parent=1 // pred_region
      _
    $region29: #{tpu_custom_call.1} parent=1 // pred_fallthru
      _
    // Predicated region
    $region30: #{tpu_custom_call.1} parent=1 // pred_check
      _
    $region31: #{tpu_custom_call.1} parent=1 // pred_check_branch
      %322 = sbr.rel (0) target = $region33
    $region32: #{tpu_custom_call.1} parent=1 // pred_region
      _
    $region33: #{tpu_custom_call.1} parent=1 // pred_fallthru
      _
    %323 = vsyncpa [#allocation8], 1
    %324 = vsyncpa [#allocation10], 1

</llo_original>
